<compile_context>
chip_gen: v7x
topology: tpu7x:2x2x1
jax: 0.10.0
libtpu: 0.0.40
codegen_flags: <defaults>
</compile_context>

<pallas_src>
import functools

import jax
import jax.numpy as jnp
from jax.experimental import pallas as pl
from jax.experimental.pallas import tpu as pltpu

K_IN = 784          # original feature dim
K_PAD = 896         # 7 * 128, lane-aligned K
H = 128             # hidden width
N_OUT = 10          # real number of classes
N_PAD = 128         # lane-dense padded output width
TILE_B_MAX = 2048   # per-tile row cap (VMEM-safe on v5e / v6e / v7x)
NEG_PAD = -1e30     # padded-logit bias -> exp underflows to 0 in the softmax sum


def _round_up(n: int, m: int) -> int:
    return ((n + m - 1) // m) * m


def mlp_kernel(x_ref, w1_ref, b1_ref, w2_ref, b2_ref, o_ref):
    # x: (TILE_B, K_PAD) bf16, w1: (K_PAD, H) bf16, b1: (1, H) f32,
    # w2: (H, N_PAD) bf16, b2: (1, N_PAD) f32 (padded cols = -1e30), o: (TILE_B, N_PAD) f32.

    # Linear(784, 128) + ReLU: bf16 MXU matmul, f32 accumulation, f32 epilogue (VPU).
    h = jnp.dot(x_ref[...], w1_ref[...], preferred_element_type=jnp.float32)
    h = jnp.maximum(h + b1_ref[...], 0.0)

    # Linear(128, 10) padded to 128 output lanes (second MXU matmul, bf16 inputs).
    logits = jnp.dot(h.astype(w2_ref.dtype), w2_ref[...],
                     preferred_element_type=jnp.float32) + b2_ref[...]

    # LogSoftmax(dim=1), numerically stable. Padded columns sit at ~-1e30 so
    # exp(z - m) underflows to exactly 0 for them; max/sum reductions go to the XLU,
    # exp/log to the EUP -> they overlap with the MXU work of the next grid step.
    m = jnp.max(logits, axis=-1, keepdims=True)
    z = logits - m
    lse = jnp.log(jnp.sum(jnp.exp(z), axis=-1, keepdims=True))
    o_ref[...] = (z - lse).astype(o_ref.dtype)


@functools.partial(jax.jit, static_argnames=("tile_b_max",))
def mlp_forward(x, w1, b1, w2, b2, *, tile_b_max: int = TILE_B_MAX):
    """x: (B, C, H, W) or (B, 784) -> (B, 10) log-probabilities (f32)."""
    B = x.shape[0]
    x2 = x.reshape(B, -1).astype(jnp.float32)
    assert x2.shape[1] == K_IN, f"expected {K_IN} features, got {x2.shape[1]}"

    # Load-balanced batch tiling: split B into equal tiles (multiple of 16 rows
    # for bf16 sublane packing), capped so double-buffered tiles fit VMEM.
    num_tiles = max(1, -(-B // tile_b_max))            # cdiv
    tile_b = _round_up(max(-(-B // num_tiles), 1), 16)  # cdiv, then round to 16
    padded_b = tile_b * num_tiles

    compute_dtype = jnp.bfloat16

    # Pad activations: batch -> padded_b (zero rows), features -> K_PAD (zero cols).
    x_p = jnp.pad(x2.astype(compute_dtype),
                  ((0, padded_b - B), (0, K_PAD - K_IN)))

    # Pad weights (zero rows/cols leave the math unchanged); biases stay f32.
    w1_p = jnp.pad(w1.astype(compute_dtype), ((0, K_PAD - K_IN), (0, 0)))
    b1_p = b1.reshape(1, H).astype(jnp.float32)
    w2_p = jnp.pad(w2.astype(compute_dtype), ((0, 0), (0, N_PAD - N_OUT)))
    b2_p = jnp.pad(b2.reshape(1, N_OUT).astype(jnp.float32),
                   ((0, 0), (0, N_PAD - N_OUT)), constant_values=NEG_PAD)

    grid = (padded_b // tile_b,)
    out = pl.pallas_call(
        mlp_kernel,
        out_shape=jax.ShapeDtypeStruct((padded_b, N_PAD), jnp.float32),
        grid=grid,
        in_specs=[
            pl.BlockSpec((tile_b, K_PAD), lambda i: (i, 0)),   # streamed activations
            pl.BlockSpec((K_PAD, H), lambda i: (0, 0)),        # resident weights
            pl.BlockSpec((1, H), lambda i: (0, 0)),
            pl.BlockSpec((H, N_PAD), lambda i: (0, 0)),
            pl.BlockSpec((1, N_PAD), lambda i: (0, 0)),
        ],
        out_specs=pl.BlockSpec((tile_b, N_PAD), lambda i: (i, 0)),
        compiler_params=pltpu.CompilerParams(
            dimension_semantics=("parallel",),  # independent batch tiles -> megacore split
        ),
    )(x_p, w1_p, b1_p, w2_p, b2_p)

    return out[:B, :N_OUT]


def init_params(key):
    """Deterministic init mimicking nn.Linear's uniform(-1/sqrt(fan_in), 1/sqrt(fan_in))."""
    k1, k2, k3, k4 = jax.random.split(key, 4)
    bound1 = 1.0 / jnp.sqrt(784.0)
    bound2 = 1.0 / jnp.sqrt(128.0)
    # stored transposed relative to torch's (out, in): here (in, out)
    w1 = jax.random.uniform(k1, (K_IN, H), jnp.float32, -bound1, bound1)
    b1 = jax.random.uniform(k2, (1, H), jnp.float32, -bound1, bound1)
    w2 = jax.random.uniform(k3, (H, N_OUT), jnp.float32, -bound2, bound2)
    b2 = jax.random.uniform(k4, (1, N_OUT), jnp.float32, -bound2, bound2)
    return w1, b1, w2, b2


def reference(x, w1, b1, w2, b2):
    """Pure-JAX reference emulating the kernel's bf16 streaming + f32 accumulation."""
    B = x.shape[0]
    bf = jnp.bfloat16
    x2 = x.reshape(B, -1).astype(bf).astype(jnp.float32)
    w1c = w1.astype(bf).astype(jnp.float32)
    w2c = w2.astype(bf).astype(jnp.float32)
    h = jnp.maximum(
        jnp.dot(x2, w1c, precision=jax.lax.Precision.HIGHEST) + b1.reshape(1, -1), 0.0)
    h = h.astype(bf).astype(jnp.float32)
    logits = jnp.dot(h, w2c, precision=jax.lax.Precision.HIGHEST) + b2.reshape(1, -1)
    return jax.nn.log_softmax(logits, axis=1)


if __name__ == "__main__":
    key = jax.random.PRNGKey(0)
    kx, kp = jax.random.split(key)
    w1, b1, w2, b2 = init_params(kp)

    # Small MNIST-like batch: (B=4, C=1, H=28, W=28) -> flattened to (4, 784).
    x = jax.random.normal(kx, (4, 1, 28, 28), jnp.float32)
    out = jax.block_until_ready(mlp_forward(x, w1, b1, w2, b2))
    ref = reference(x, w1, b1, w2, b2)
    assert out.shape == (4, 10)
    assert jnp.allclose(out, ref, atol=2e-2, rtol=2e-2), float(jnp.max(jnp.abs(out - ref)))

    # Exercise batch tiling + padding: B=100 with a small tile cap -> several grid steps.
    x_big = jax.random.normal(kx, (100, 1, 28, 28), jnp.float32)
    out_big = jax.block_until_ready(mlp_forward(x_big, w1, b1, w2, b2, tile_b_max=32))
    ref_big = reference(x_big, w1, b1, w2, b2)
    assert out_big.shape == (100, 10)
    assert jnp.allclose(out_big, ref_big, atol=2e-2, rtol=2e-2), float(
        jnp.max(jnp.abs(out_big - ref_big)))

    print("KERNEL_OK")
</pallas_src>

<mosaic_0001>
module attributes {stable_mosaic.version = 11 : i64} {
  func.func @mlp_kernel(%arg0: i32, %arg1: memref<16x896xbf16, #tpu.memory_space<vmem>>, %arg2: memref<896x128xbf16, #tpu.memory_space<vmem>>, %arg3: memref<1x128xf32, #tpu.memory_space<vmem>>, %arg4: memref<128x128xbf16, #tpu.memory_space<vmem>>, %arg5: memref<1x128xf32, #tpu.memory_space<vmem>>, %arg6: memref<16x128xf32, #tpu.memory_space<vmem>>) attributes {dimension_semantics = [#tpu.dimension_semantics<parallel>], iteration_bounds = array<i64: 1>, scalar_prefetch = 0 : i64, scratch_operands = 0 : i64, tpu.core_type = #tpu.core_type<tc>, window_params = [{transform_indices = @transform_0, window_bounds = array<i64: 16, 896>}, {pipeline_mode = #tpu.pipeline_mode<synchronous>, transform_indices = @transform_1, window_bounds = array<i64: 896, 128>}, {pipeline_mode = #tpu.pipeline_mode<synchronous>, transform_indices = @transform_2, window_bounds = array<i64: 1, 128>}, {pipeline_mode = #tpu.pipeline_mode<synchronous>, transform_indices = @transform_3, window_bounds = array<i64: 128, 128>}, {pipeline_mode = #tpu.pipeline_mode<synchronous>, transform_indices = @transform_4, window_bounds = array<i64: 1, 128>}, {transform_indices = @transform_5, window_bounds = array<i64: 16, 128>}]} {
    %c0 = arith.constant 0 : index
    %c0_0 = arith.constant 0 : index
    %0 = vector.load %arg1[%c0, %c0_0] : memref<16x896xbf16, #tpu.memory_space<vmem>>, vector<16x896xbf16>
    %c0_1 = arith.constant 0 : index
    %c0_2 = arith.constant 0 : index
    %1 = vector.load %arg2[%c0_1, %c0_2] : memref<896x128xbf16, #tpu.memory_space<vmem>>, vector<896x128xbf16>
    %cst = arith.constant dense<0.000000e+00> : vector<16x128xf32>
    %2 = tpu.matmul %0, %1, %cst {dimension_numbers = #tpu.dot_dimension_numbers<[1], [0], [0], [1], [0, 0, 1, 1], [], []>} : vector<16x896xbf16>, vector<896x128xbf16>, vector<16x128xf32> -> vector<16x128xf32>
    %c0_3 = arith.constant 0 : index
    %c0_4 = arith.constant 0 : index
    %3 = vector.load %arg3[%c0_3, %c0_4] : memref<1x128xf32, #tpu.memory_space<vmem>>, vector<1x128xf32>
    %4 = vector.broadcast %3 : vector<1x128xf32> to vector<16x128xf32>
    %5 = arith.addf %2, %4 : vector<16x128xf32>
    %cst_5 = arith.constant 0.000000e+00 : f32
    %6 = vector.broadcast %cst_5 : f32 to vector<16x128xf32>
    %7 = arith.maximumf %5, %6 : vector<16x128xf32>
    %8 = arith.truncf %7 : vector<16x128xf32> to vector<16x128xbf16>
    %c0_6 = arith.constant 0 : index
    %c0_7 = arith.constant 0 : index
    %9 = vector.load %arg4[%c0_6, %c0_7] : memref<128x128xbf16, #tpu.memory_space<vmem>>, vector<128x128xbf16>
    %cst_8 = arith.constant dense<0.000000e+00> : vector<16x128xf32>
    %10 = tpu.matmul %8, %9, %cst_8 {dimension_numbers = #tpu.dot_dimension_numbers<[1], [0], [0], [1], [0, 0, 1, 1], [], []>} : vector<16x128xbf16>, vector<128x128xbf16>, vector<16x128xf32> -> vector<16x128xf32>
    %c0_9 = arith.constant 0 : index
    %c0_10 = arith.constant 0 : index
    %11 = vector.load %arg5[%c0_9, %c0_10] : memref<1x128xf32, #tpu.memory_space<vmem>>, vector<1x128xf32>
    %12 = vector.broadcast %11 : vector<1x128xf32> to vector<16x128xf32>
    %13 = arith.addf %10, %12 : vector<16x128xf32>
    %cst_11 = arith.constant dense<0xFF800000> : vector<16xf32>
    %14 = vector.multi_reduction <maximumf>, %13, %cst_11 [1] : vector<16x128xf32> to vector<16xf32>
    %15 = vector.shape_cast %14 : vector<16xf32> to vector<16x1xf32>
    %16 = vector.broadcast %15 : vector<16x1xf32> to vector<16x128xf32>
    %17 = arith.subf %13, %16 : vector<16x128xf32>
    %18 = math.exp %17 : vector<16x128xf32>
    %cst_12 = arith.constant dense<0.000000e+00> : vector<16xf32>
    %19 = vector.multi_reduction <add>, %18, %cst_12 [1] : vector<16x128xf32> to vector<16xf32>
    %20 = vector.shape_cast %19 : vector<16xf32> to vector<16x1xf32>
    %21 = math.log %20 : vector<16x1xf32>
    %22 = vector.broadcast %21 : vector<16x1xf32> to vector<16x128xf32>
    %23 = arith.subf %17, %22 : vector<16x128xf32>
    %c0_13 = arith.constant 0 : index
    %c0_14 = arith.constant 0 : index
    %24 = vector.load %arg6[%c0_13, %c0_14] : memref<16x128xf32, #tpu.memory_space<vmem>>, vector<16x128xf32>
    tpu.vector_store %arg6[%c0_13, %c0_14], %23 {strides = array<i32>} : memref<16x128xf32, #tpu.memory_space<vmem>>, vector<16x128xf32>,
    return
  }
  func.func @transform_0(%arg0: i32) -> (i32, i32) {
    %c0_i32 = arith.constant 0 : i32
    %c0_i32_0 = arith.constant 0 : i32
    return %arg0, %c0_i32 : i32, i32
  }
  func.func @transform_1(%arg0: i32) -> (i32, i32) {
    %c0_i32 = arith.constant 0 : i32
    %c0_i32_0 = arith.constant 0 : i32
    %c0_i32_1 = arith.constant 0 : i32
    return %c0_i32, %c0_i32_0 : i32, i32
  }
  func.func @transform_2(%arg0: i32) -> (i32, i32) {
    %c0_i32 = arith.constant 0 : i32
    %c0_i32_0 = arith.constant 0 : i32
    %c0_i32_1 = arith.constant 0 : i32
    return %c0_i32, %c0_i32_0 : i32, i32
  }
  func.func @transform_3(%arg0: i32) -> (i32, i32) {
    %c0_i32 = arith.constant 0 : i32
    %c0_i32_0 = arith.constant 0 : i32
    %c0_i32_1 = arith.constant 0 : i32
    return %c0_i32, %c0_i32_0 : i32, i32
  }
  func.func @transform_4(%arg0: i32) -> (i32, i32) {
    %c0_i32 = arith.constant 0 : i32
    %c0_i32_0 = arith.constant 0 : i32
    %c0_i32_1 = arith.constant 0 : i32
    return %c0_i32, %c0_i32_0 : i32, i32
  }
  func.func @transform_5(%arg0: i32) -> (i32, i32) {
    %c0_i32 = arith.constant 0 : i32
    %c0_i32_0 = arith.constant 0 : i32
    return %arg0, %c0_i32 : i32, i32
  }
}

</mosaic_0001>

<llo_original>
// kernel: mlp_forward.1
$region0: #{mlp_forward.1}
  #allocation0 [shape = 'u32[]', space=smem, size = 0x4, offset = 0x4, fixed_abs, tag = 'smem constant byte address 0x4 - core index']
  #allocation1 [shape = 'u32[144,128]{1,0:T(1,128)}', space=vmem, size = 0x12000, scoped, tag = 'internal scratch']
  %s0 = inlined_call_operand.vmem [shape: bf16[16,896], index: 0, kind: input, shape index: {}]
  %s1 = inlined_call_operand.vmem [shape: bf16[896,128], index: 1, kind: input, shape index: {}]
  %s2 = inlined_call_operand.vmem [shape: f32[1,128], index: 2, kind: input, shape index: {}]
  %s3 = inlined_call_operand.vmem [shape: bf16[128,128], index: 3, kind: input, shape index: {}]
  %s4 = inlined_call_operand.vmem [shape: f32[1,128], index: 4, kind: input, shape index: {}]
  %s5 = inlined_call_operand.vmem [shape: f32[16,128], index: 5, kind: output, shape index: {}]
  %s6 = sld [smem:[#allocation0]]
  $region30: #{mlp_forward.1} parent=0
    _
  %s8 = ssub.s32 1, %s6
  %s9 = scalar_select 0, %s8, %s6
  // Predicated region
  $region2: #{mlp_forward.1} parent=0 // pred_check
    _
  $region3: #{mlp_forward.1} parent=0 // pred_check_branch
    %11 = sbr.rel (0) target = $region5
  $region4: #{mlp_forward.1} parent=0 // pred_region
    _
  $region5: #{mlp_forward.1} parent=0 // pred_fallthru
    _
  // Predicated region
  $region6: #{mlp_forward.1} parent=0 // pred_check
    _
  $region7: #{mlp_forward.1} parent=0 // pred_check_branch
    %13 = sbr.rel (0) target = $region9
  $region8: #{mlp_forward.1} parent=0 // pred_region
    _
  $region9: #{mlp_forward.1} parent=0 // pred_fallthru
    _
  // Predicated region
  $region10: #{mlp_forward.1} parent=0 // pred_check
    _
  $region11: #{mlp_forward.1} parent=0 // pred_check_branch
    %15 = sbr.rel (0) target = $region13
  $region12: #{mlp_forward.1} parent=0 // pred_region
    _
  $region13: #{mlp_forward.1} parent=0 // pred_fallthru
    _
  // Predicated region
  $region14: #{mlp_forward.1} parent=0 // pred_check
    _
  $region15: #{mlp_forward.1} parent=0 // pred_check_branch
    %17 = sbr.rel (0) target = $region17
  $region16: #{mlp_forward.1} parent=0 // pred_region
    _
  $region17: #{mlp_forward.1} parent=0 // pred_fallthru
    _
  // Predicated region
  $region18: #{mlp_forward.1} parent=0 // pred_check
    _
  $region19: #{mlp_forward.1} parent=0 // pred_check_branch
    %19 = sbr.rel (0) target = $region21
  $region20: #{mlp_forward.1} parent=0 // pred_region
    _
  $region21: #{mlp_forward.1} parent=0 // pred_fallthru
    _
  %v21 = vld [vmem:[%s0] sm:$0xff]
  %v22 = vld [vmem:[%s0 + $0x8] sm:$0xff]
  %v23 = vld [vmem:[%s0 + $0x10] sm:$0xff]
  %v24 = vld [vmem:[%s0 + $0x18] sm:$0xf]
  %v25 = vld [vmem:[%s0 + $0x1c] sm:$0xff]
  %v26 = vld [vmem:[%s0 + $0x24] sm:$0xff]
  %v27 = vld [vmem:[%s0 + $0x2c] sm:$0xff]
  %v28 = vld [vmem:[%s0 + $0x34] sm:$0xf]
  %v29 = vld [vmem:[%s1] sm:$0xf]
  %v30 = vld [vmem:[%s1 + $0x4] sm:$0xf]
  %v31 = vld [vmem:[%s1 + $0x8] sm:$0xf]
  %v32 = vld [vmem:[%s1 + $0xc] sm:$0xf]
  %v33 = vld [vmem:[%s1 + $0x10] sm:$0xf]
  %v34 = vld [vmem:[%s1 + $0x14] sm:$0xf]
  %v35 = vld [vmem:[%s1 + $0x18] sm:$0xf]
  %v36 = vld [vmem:[%s1 + $0x1c] sm:$0xf]
  %v37 = vld [vmem:[%s1 + $0x20] sm:$0xf]
  %v38 = vld [vmem:[%s1 + $0x24] sm:$0xf]
  %v39 = vld [vmem:[%s1 + $0x28] sm:$0xf]
  %v40 = vld [vmem:[%s1 + $0x2c] sm:$0xf]
  %v41 = vld [vmem:[%s1 + $0x30] sm:$0xf]
  %v42 = vld [vmem:[%s1 + $0x34] sm:$0xf]
  %v43 = vld [vmem:[%s1 + $0x38] sm:$0xf]
  %v44 = vld [vmem:[%s1 + $0x3c] sm:$0xf]
  %v45 = vld [vmem:[%s1 + $0x40] sm:$0xf]
  %v46 = vld [vmem:[%s1 + $0x44] sm:$0xf]
  %v47 = vld [vmem:[%s1 + $0x48] sm:$0xf]
  %v48 = vld [vmem:[%s1 + $0x4c] sm:$0xf]
  %v49 = vld [vmem:[%s1 + $0x50] sm:$0xf]
  %v50 = vld [vmem:[%s1 + $0x54] sm:$0xf]
  %v51 = vld [vmem:[%s1 + $0x58] sm:$0xf]
  %v52 = vld [vmem:[%s1 + $0x5c] sm:$0xf]
  %v53 = vld [vmem:[%s1 + $0x60] sm:$0xf]
  %v54 = vld [vmem:[%s1 + $0x64] sm:$0xf]
  %v55 = vld [vmem:[%s1 + $0x68] sm:$0xf]
  %v56 = vld [vmem:[%s1 + $0x6c] sm:$0xf]
  %v57 = vld [vmem:[%s1 + $0x70] sm:$0xf]
  %v58 = vld [vmem:[%s1 + $0x74] sm:$0xf]
  %v59 = vld [vmem:[%s1 + $0x78] sm:$0xf]
  %v60 = vld [vmem:[%s1 + $0x7c] sm:$0xf]
  %v61 = vld [vmem:[%s1 + $0x80] sm:$0xf]
  %v62 = vld [vmem:[%s1 + $0x84] sm:$0xf]
  %v63 = vld [vmem:[%s1 + $0x88] sm:$0xf]
  %v64 = vld [vmem:[%s1 + $0x8c] sm:$0xf]
  %v65 = vld [vmem:[%s1 + $0x90] sm:$0xf]
  %v66 = vld [vmem:[%s1 + $0x94] sm:$0xf]
  %v67 = vld [vmem:[%s1 + $0x98] sm:$0xf]
  %v68 = vld [vmem:[%s1 + $0x9c] sm:$0xf]
  %v69 = vld [vmem:[%s1 + $0xa0] sm:$0xf]
  %v70 = vld [vmem:[%s1 + $0xa4] sm:$0xf]
  %v71 = vld [vmem:[%s1 + $0xa8] sm:$0xf]
  %v72 = vld [vmem:[%s1 + $0xac] sm:$0xf]
  %v73 = vld [vmem:[%s1 + $0xb0] sm:$0xf]
  %v74 = vld [vmem:[%s1 + $0xb4] sm:$0xf]
  %v75 = vld [vmem:[%s1 + $0xb8] sm:$0xf]
  %v76 = vld [vmem:[%s1 + $0xbc] sm:$0xf]
  %v77 = vld [vmem:[%s1 + $0xc0] sm:$0xf]
  %v78 = vld [vmem:[%s1 + $0xc4] sm:$0xf]
  %v79 = vld [vmem:[%s1 + $0xc8] sm:$0xf]
  %v80 = vld [vmem:[%s1 + $0xcc] sm:$0xf]
  %v81 = vld [vmem:[%s1 + $0xd0] sm:$0xf]
  %v82 = vld [vmem:[%s1 + $0xd4] sm:$0xf]
  %v83 = vld [vmem:[%s1 + $0xd8] sm:$0xf]
  %v84 = vld [vmem:[%s1 + $0xdc] sm:$0xf]
  %v85 = vld [vmem:[%s1 + $0xe0] sm:$0xf]
  %v86 = vld [vmem:[%s1 + $0xe4] sm:$0xf]
  %v87 = vld [vmem:[%s1 + $0xe8] sm:$0xf]
  %v88 = vld [vmem:[%s1 + $0xec] sm:$0xf]
  %v89 = vld [vmem:[%s1 + $0xf0] sm:$0xf]
  %v90 = vld [vmem:[%s1 + $0xf4] sm:$0xf]
  %v91 = vld [vmem:[%s1 + $0xf8] sm:$0xf]
  %v92 = vld [vmem:[%s1 + $0xfc] sm:$0xf]
  %v93 = vld [vmem:[%s1 + $0x100] sm:$0xf]
  %v94 = vld [vmem:[%s1 + $0x104] sm:$0xf]
  %v95 = vld [vmem:[%s1 + $0x108] sm:$0xf]
  %v96 = vld [vmem:[%s1 + $0x10c] sm:$0xf]
  %v97 = vld [vmem:[%s1 + $0x110] sm:$0xf]
  %v98 = vld [vmem:[%s1 + $0x114] sm:$0xf]
  %v99 = vld [vmem:[%s1 + $0x118] sm:$0xf]
  %v100 = vld [vmem:[%s1 + $0x11c] sm:$0xf]
  %v101 = vld [vmem:[%s1 + $0x120] sm:$0xf]
  %v102 = vld [vmem:[%s1 + $0x124] sm:$0xf]
  %v103 = vld [vmem:[%s1 + $0x128] sm:$0xf]
  %v104 = vld [vmem:[%s1 + $0x12c] sm:$0xf]
  %v105 = vld [vmem:[%s1 + $0x130] sm:$0xf]
  %v106 = vld [vmem:[%s1 + $0x134] sm:$0xf]
  %v107 = vld [vmem:[%s1 + $0x138] sm:$0xf]
  %v108 = vld [vmem:[%s1 + $0x13c] sm:$0xf]
  %v109 = vld [vmem:[%s1 + $0x140] sm:$0xf]
  %v110 = vld [vmem:[%s1 + $0x144] sm:$0xf]
  %v111 = vld [vmem:[%s1 + $0x148] sm:$0xf]
  %v112 = vld [vmem:[%s1 + $0x14c] sm:$0xf]
  %v113 = vld [vmem:[%s1 + $0x150] sm:$0xf]
  %v114 = vld [vmem:[%s1 + $0x154] sm:$0xf]
  %v115 = vld [vmem:[%s1 + $0x158] sm:$0xf]
  %v116 = vld [vmem:[%s1 + $0x15c] sm:$0xf]
  %v117 = vld [vmem:[%s1 + $0x160] sm:$0xf]
  %v118 = vld [vmem:[%s1 + $0x164] sm:$0xf]
  %v119 = vld [vmem:[%s1 + $0x168] sm:$0xf]
  %v120 = vld [vmem:[%s1 + $0x16c] sm:$0xf]
  %v121 = vld [vmem:[%s1 + $0x170] sm:$0xf]
  %v122 = vld [vmem:[%s1 + $0x174] sm:$0xf]
  %v123 = vld [vmem:[%s1 + $0x178] sm:$0xf]
  %v124 = vld [vmem:[%s1 + $0x17c] sm:$0xf]
  %v125 = vld [vmem:[%s1 + $0x180] sm:$0xf]
  %v126 = vld [vmem:[%s1 + $0x184] sm:$0xf]
  %v127 = vld [vmem:[%s1 + $0x188] sm:$0xf]
  %v128 = vld [vmem:[%s1 + $0x18c] sm:$0xf]
  %v129 = vld [vmem:[%s1 + $0x190] sm:$0xf]
  %v130 = vld [vmem:[%s1 + $0x194] sm:$0xf]
  %v131 = vld [vmem:[%s1 + $0x198] sm:$0xf]
  %v132 = vld [vmem:[%s1 + $0x19c] sm:$0xf]
  %v133 = vld [vmem:[%s1 + $0x1a0] sm:$0xf]
  %v134 = vld [vmem:[%s1 + $0x1a4] sm:$0xf]
  %v135 = vld [vmem:[%s1 + $0x1a8] sm:$0xf]
  %v136 = vld [vmem:[%s1 + $0x1ac] sm:$0xf]
  %v137 = vld [vmem:[%s1 + $0x1b0] sm:$0xf]
  %v138 = vld [vmem:[%s1 + $0x1b4] sm:$0xf]
  %v139 = vld [vmem:[%s1 + $0x1b8] sm:$0xf]
  %v140 = vld [vmem:[%s1 + $0x1bc] sm:$0xf]
  %v141 = vld [vmem:[%s2] sm:$0x1]
  %v143 = vlaneseq
  %v144 = vshrl.u32 %v143, 7
  %v145 = vsub.s32 0, %v144
  %v146 = vrot.slane %v141, %v145
  %v156 = vunpack.c.l.b16 %v21
  %v157 = vunpack.c.h.b16 %v21
  %v158 = vunpack.c.l.b16 %v22
  %v159 = vunpack.c.h.b16 %v22
  %v160 = vunpack.c.l.b16 %v23
  %v161 = vunpack.c.h.b16 %v23
  %v162 = vunpack.c.l.b16 %v24
  %v163 = vunpack.c.l.b16 %v25
  %v164 = vunpack.c.h.b16 %v25
  %v165 = vunpack.c.l.b16 %v26
  %v166 = vunpack.c.h.b16 %v26
  %v167 = vunpack.c.l.b16 %v27
  %v168 = vunpack.c.h.b16 %v27
  %v169 = vunpack.c.l.b16 %v28
  %v170 = vpack.c.b16 %v163, %v156
  %v171 = vpack.c.b16 %v164, %v157
  %v172 = vpack.c.b16 %v165, %v158
  %v173 = vpack.c.b16 %v166, %v159
  %v174 = vpack.c.b16 %v167, %v160
  %v175 = vpack.c.b16 %v168, %v161
  %v176 = vpack.c.b16 %v169, %v162
  %v296 = vunpack.c.l.b16 %v29
  %v297 = vunpack.c.l.b16 %v30
  %v298 = vunpack.c.l.b16 %v31
  %v299 = vunpack.c.l.b16 %v32
  %v300 = vunpack.c.l.b16 %v33
  %v301 = vunpack.c.l.b16 %v34
  %v302 = vunpack.c.l.b16 %v35
  %v303 = vunpack.c.l.b16 %v36
  %v304 = vunpack.c.l.b16 %v37
  %v305 = vunpack.c.l.b16 %v38
  %v306 = vunpack.c.l.b16 %v39
  %v307 = vunpack.c.l.b16 %v40
  %v308 = vunpack.c.l.b16 %v41
  %v309 = vunpack.c.l.b16 %v42
  %v310 = vunpack.c.l.b16 %v43
  %v311 = vunpack.c.l.b16 %v44
  %v312 = vunpack.c.l.b16 %v45
  %v313 = vunpack.c.l.b16 %v46
  %v314 = vunpack.c.l.b16 %v47
  %v315 = vunpack.c.l.b16 %v48
  %v316 = vunpack.c.l.b16 %v49
  %v317 = vunpack.c.l.b16 %v50
  %v318 = vunpack.c.l.b16 %v51
  %v319 = vunpack.c.l.b16 %v52
  %v320 = vunpack.c.l.b16 %v53
  %v321 = vunpack.c.l.b16 %v54
  %v322 = vunpack.c.l.b16 %v55
  %v323 = vunpack.c.l.b16 %v56
  %v324 = vunpack.c.l.b16 %v57
  %v325 = vunpack.c.l.b16 %v58
  %v326 = vunpack.c.l.b16 %v59
  %v327 = vunpack.c.l.b16 %v60
  %v328 = vunpack.c.l.b16 %v61
  %v329 = vunpack.c.l.b16 %v62
  %v330 = vunpack.c.l.b16 %v63
  %v331 = vunpack.c.l.b16 %v64
  %v332 = vunpack.c.l.b16 %v65
  %v333 = vunpack.c.l.b16 %v66
  %v334 = vunpack.c.l.b16 %v67
  %v335 = vunpack.c.l.b16 %v68
  %v336 = vunpack.c.l.b16 %v69
  %v337 = vunpack.c.l.b16 %v70
  %v338 = vunpack.c.l.b16 %v71
  %v339 = vunpack.c.l.b16 %v72
  %v340 = vunpack.c.l.b16 %v73
  %v341 = vunpack.c.l.b16 %v74
  %v342 = vunpack.c.l.b16 %v75
  %v343 = vunpack.c.l.b16 %v76
  %v344 = vunpack.c.l.b16 %v77
  %v345 = vunpack.c.l.b16 %v78
  %v346 = vunpack.c.l.b16 %v79
  %v347 = vunpack.c.l.b16 %v80
  %v348 = vunpack.c.l.b16 %v81
  %v349 = vunpack.c.l.b16 %v82
  %v350 = vunpack.c.l.b16 %v83
  %v351 = vunpack.c.l.b16 %v84
  %v352 = vunpack.c.l.b16 %v85
  %v353 = vunpack.c.l.b16 %v86
  %v354 = vunpack.c.l.b16 %v87
  %v355 = vunpack.c.l.b16 %v88
  %v356 = vunpack.c.l.b16 %v89
  %v357 = vunpack.c.l.b16 %v90
  %v358 = vunpack.c.l.b16 %v91
  %v359 = vunpack.c.l.b16 %v92
  %v360 = vunpack.c.l.b16 %v93
  %v361 = vunpack.c.l.b16 %v94
  %v362 = vunpack.c.l.b16 %v95
  %v363 = vunpack.c.l.b16 %v96
  %v364 = vunpack.c.l.b16 %v97
  %v365 = vunpack.c.l.b16 %v98
  %v366 = vunpack.c.l.b16 %v99
  %v367 = vunpack.c.l.b16 %v100
  %v368 = vunpack.c.l.b16 %v101
  %v369 = vunpack.c.l.b16 %v102
  %v370 = vunpack.c.l.b16 %v103
  %v371 = vunpack.c.l.b16 %v104
  %v372 = vunpack.c.l.b16 %v105
  %v373 = vunpack.c.l.b16 %v106
  %v374 = vunpack.c.l.b16 %v107
  %v375 = vunpack.c.l.b16 %v108
  %v376 = vunpack.c.l.b16 %v109
  %v377 = vunpack.c.l.b16 %v110
  %v378 = vunpack.c.l.b16 %v111
  %v379 = vunpack.c.l.b16 %v112
  %v380 = vunpack.c.l.b16 %v113
  %v381 = vunpack.c.l.b16 %v114
  %v382 = vunpack.c.l.b16 %v115
  %v383 = vunpack.c.l.b16 %v116
  %v384 = vunpack.c.l.b16 %v117
  %v385 = vunpack.c.l.b16 %v118
  %v386 = vunpack.c.l.b16 %v119
  %v387 = vunpack.c.l.b16 %v120
  %v388 = vunpack.c.l.b16 %v121
  %v389 = vunpack.c.l.b16 %v122
  %v390 = vunpack.c.l.b16 %v123
  %v391 = vunpack.c.l.b16 %v124
  %v392 = vunpack.c.l.b16 %v125
  %v393 = vunpack.c.l.b16 %v126
  %v394 = vunpack.c.l.b16 %v127
  %v395 = vunpack.c.l.b16 %v128
  %v396 = vunpack.c.l.b16 %v129
  %v397 = vunpack.c.l.b16 %v130
  %v398 = vunpack.c.l.b16 %v131
  %v399 = vunpack.c.l.b16 %v132
  %v400 = vunpack.c.l.b16 %v133
  %v401 = vunpack.c.l.b16 %v134
  %v402 = vunpack.c.l.b16 %v135
  %v403 = vunpack.c.l.b16 %v136
  %v404 = vunpack.c.l.b16 %v137
  %v405 = vunpack.c.l.b16 %v138
  %v406 = vunpack.c.l.b16 %v139
  %v407 = vunpack.c.l.b16 %v140
  %v408 = vpack.c.b16 %v297, %v296
  %v409 = vpack.c.b16 %v299, %v298
  %v410 = vpack.c.b16 %v301, %v300
  %v411 = vpack.c.b16 %v303, %v302
  %v412 = vpack.c.b16 %v305, %v304
  %v413 = vpack.c.b16 %v307, %v306
  %v414 = vpack.c.b16 %v309, %v308
  %v415 = vpack.c.b16 %v311, %v310
  %v416 = vpack.c.b16 %v313, %v312
  %v417 = vpack.c.b16 %v315, %v314
  %v418 = vpack.c.b16 %v317, %v316
  %v419 = vpack.c.b16 %v319, %v318
  %v420 = vpack.c.b16 %v321, %v320
  %v421 = vpack.c.b16 %v323, %v322
  %v422 = vpack.c.b16 %v325, %v324
  %v423 = vpack.c.b16 %v327, %v326
  %v424 = vpack.c.b16 %v329, %v328
  %v425 = vpack.c.b16 %v331, %v330
  %v426 = vpack.c.b16 %v333, %v332
  %v427 = vpack.c.b16 %v335, %v334
  %v428 = vpack.c.b16 %v337, %v336
  %v429 = vpack.c.b16 %v339, %v338
  %v430 = vpack.c.b16 %v341, %v340
  %v431 = vpack.c.b16 %v343, %v342
  %v432 = vpack.c.b16 %v345, %v344
  %v433 = vpack.c.b16 %v347, %v346
  %v434 = vpack.c.b16 %v349, %v348
  %v435 = vpack.c.b16 %v351, %v350
  %v436 = vpack.c.b16 %v353, %v352
  %v437 = vpack.c.b16 %v355, %v354
  %v438 = vpack.c.b16 %v357, %v356
  %v439 = vpack.c.b16 %v359, %v358
  %v440 = vpack.c.b16 %v361, %v360
  %v441 = vpack.c.b16 %v363, %v362
  %v442 = vpack.c.b16 %v365, %v364
  %v443 = vpack.c.b16 %v367, %v366
  %v444 = vpack.c.b16 %v369, %v368
  %v445 = vpack.c.b16 %v371, %v370
  %v446 = vpack.c.b16 %v373, %v372
  %v447 = vpack.c.b16 %v375, %v374
  %v448 = vpack.c.b16 %v377, %v376
  %v449 = vpack.c.b16 %v379, %v378
  %v450 = vpack.c.b16 %v381, %v380
  %v451 = vpack.c.b16 %v383, %v382
  %v452 = vpack.c.b16 %v385, %v384
  %v453 = vpack.c.b16 %v387, %v386
  %v454 = vpack.c.b16 %v389, %v388
  %v455 = vpack.c.b16 %v391, %v390
  %v456 = vpack.c.b16 %v393, %v392
  %v457 = vpack.c.b16 %v395, %v394
  %v458 = vpack.c.b16 %v397, %v396
  %v459 = vpack.c.b16 %v399, %v398
  %v460 = vpack.c.b16 %v401, %v400
  %v461 = vpack.c.b16 %v403, %v402
  %v462 = vpack.c.b16 %v405, %v404
  %v463 = vpack.c.b16 %v407, %v406
  %520 = vmatprep.subr.bf16.mxu0 0
  %521 = vmatpush1.bf16.msra.mxu0 %v408
  %522 = vmatprep.subr.bf16.mxu0 0
  %523 = vmatpush1.bf16.msra.mxu0 %v409
  %524 = vmatprep.subr.bf16.mxu0 0
  %525 = vmatpush1.bf16.msra.mxu0 %v410
  %526 = vmatprep.subr.bf16.mxu0 0
  %527 = vmatpush1.bf16.msra.mxu0 %v411
  %528 = vmatprep.subr.bf16.mxu0 0
  %529 = vmatpush1.bf16.msra.mxu0 %v412
  %530 = vmatprep.subr.bf16.mxu0 0
  %531 = vmatpush1.bf16.msra.mxu0 %v413
  %532 = vmatprep.subr.bf16.mxu0 0
  %533 = vmatpush1.bf16.msra.mxu0 %v414
  %534 = vmatprep.subr.bf16.mxu0 0
  %535 = vmatpush1.bf16.msra.mxu0 %v415
  %536 = vmatprep.subr.bf16.mxu0 0
  %537 = vmatpush1.bf16.msra.mxu0 %v416
  %538 = vmatprep.subr.bf16.mxu0 0
  %539 = vmatpush1.bf16.msra.mxu0 %v417
  %540 = vmatprep.subr.bf16.mxu0 0
  %541 = vmatpush1.bf16.msra.mxu0 %v418
  %542 = vmatprep.subr.bf16.mxu0 0
  %543 = vmatpush1.bf16.msra.mxu0 %v419
  %544 = vmatprep.subr.bf16.mxu0 0
  %545 = vmatpush1.bf16.msra.mxu0 %v420
  %546 = vmatprep.subr.bf16.mxu0 0
  %547 = vmatpush1.bf16.msra.mxu0 %v421
  %548 = vmatprep.subr.bf16.mxu0 0
  %549 = vmatpush1.bf16.msra.mxu0 %v422
  %550 = vmatprep.subr.bf16.mxu0 0
  %551 = vmatpush1.bf16.msra.mxu0 %v423
  %552 = vmatprep.mubr.bf16.mxu0 %v171
  %553 = vmatmul.mubr.bf16.gmra.mrb[0].mxu0 %v170
  %v554 = vpop.f32.mrb[0].mxu0
  %v555 = vadd.f32 %v146, %v554
  %v556 = vpop.f32.mrb[0].mxu0
  %v557 = vpop.f32.mrb[0].mxu0
  %v558 = vadd.f32 %v146, %v557
  %v559 = vpop.f32.mrb[0].mxu0
  %560 = vdwg.mxu0
  %561 = vmatprep.subr.bf16.mxu0 0
  %562 = vmatpush1.bf16.msra.mxu0 %v424
  %563 = vmatprep.subr.bf16.mxu0 0
  %564 = vmatpush1.bf16.msra.mxu0 %v425
  %565 = vmatprep.subr.bf16.mxu0 0
  %566 = vmatpush1.bf16.msra.mxu0 %v426
  %567 = vmatprep.subr.bf16.mxu0 0
  %568 = vmatpush1.bf16.msra.mxu0 %v427
  %569 = vmatprep.subr.bf16.mxu0 0
  %570 = vmatpush1.bf16.msra.mxu0 %v428
  %571 = vmatprep.subr.bf16.mxu0 0
  %572 = vmatpush1.bf16.msra.mxu0 %v429
  %573 = vmatprep.subr.bf16.mxu0 0
  %574 = vmatpush1.bf16.msra.mxu0 %v430
  %575 = vmatprep.subr.bf16.mxu0 0
  %576 = vmatpush1.bf16.msra.mxu0 %v431
  %577 = vmatprep.subr.bf16.mxu0 0
  %578 = vmatpush1.bf16.msra.mxu0 %v432
  %579 = vmatprep.subr.bf16.mxu0 0
  %580 = vmatpush1.bf16.msra.mxu0 %v433
  %581 = vmatprep.subr.bf16.mxu0 0
  %582 = vmatpush1.bf16.msra.mxu0 %v434
  %583 = vmatprep.subr.bf16.mxu0 0
  %584 = vmatpush1.bf16.msra.mxu0 %v435
  %585 = vmatprep.subr.bf16.mxu0 0
  %586 = vmatpush1.bf16.msra.mxu0 %v436
  %587 = vmatprep.subr.bf16.mxu0 0
  %588 = vmatpush1.bf16.msra.mxu0 %v437
  %589 = vmatprep.subr.bf16.mxu0 0
  %590 = vmatpush1.bf16.msra.mxu0 %v438
  %591 = vmatprep.subr.bf16.mxu0 0
  %592 = vmatpush1.bf16.msra.mxu0 %v439
  %593 = vmatprep.mubr.bf16.mxu0 %v173
  %594 = vmatmul.mubr.bf16.gmra.mrb[0].mxu0 %v172
  %v595 = vpop.f32.mrb[0].mxu0
  %v596 = vadd.f32 %v555, %v595
  %v597 = vpop.f32.mrb[0].mxu0
  %v598 = vpop.f32.mrb[0].mxu0
  %v599 = vadd.f32 %v558, %v598
  %v600 = vpop.f32.mrb[0].mxu0
  %601 = vdwg.mxu0
  %602 = vmatprep.subr.bf16.mxu0 0
  %603 = vmatpush1.bf16.msra.mxu0 %v440
  %604 = vmatprep.subr.bf16.mxu0 0
  %605 = vmatpush1.bf16.msra.mxu0 %v441
  %606 = vmatprep.subr.bf16.mxu0 0
  %607 = vmatpush1.bf16.msra.mxu0 %v442
  %608 = vmatprep.subr.bf16.mxu0 0
  %609 = vmatpush1.bf16.msra.mxu0 %v443
  %610 = vmatprep.subr.bf16.mxu0 0
  %611 = vmatpush1.bf16.msra.mxu0 %v444
  %612 = vmatprep.subr.bf16.mxu0 0
  %613 = vmatpush1.bf16.msra.mxu0 %v445
  %614 = vmatprep.subr.bf16.mxu0 0
  %615 = vmatpush1.bf16.msra.mxu0 %v446
  %616 = vmatprep.subr.bf16.mxu0 0
  %617 = vmatpush1.bf16.msra.mxu0 %v447
  %618 = vmatprep.subr.bf16.mxu0 0
  %619 = vmatpush1.bf16.msra.mxu0 %v448
  %620 = vmatprep.subr.bf16.mxu0 0
  %621 = vmatpush1.bf16.msra.mxu0 %v449
  %622 = vmatprep.subr.bf16.mxu0 0
  %623 = vmatpush1.bf16.msra.mxu0 %v450
  %624 = vmatprep.subr.bf16.mxu0 0
  %625 = vmatpush1.bf16.msra.mxu0 %v451
  %626 = vmatprep.subr.bf16.mxu0 0
  %627 = vmatpush1.bf16.msra.mxu0 %v452
  %628 = vmatprep.subr.bf16.mxu0 0
  %629 = vmatpush1.bf16.msra.mxu0 %v453
  %630 = vmatprep.subr.bf16.mxu0 0
  %631 = vmatpush1.bf16.msra.mxu0 %v454
  %632 = vmatprep.subr.bf16.mxu0 0
  %633 = vmatpush1.bf16.msra.mxu0 %v455
  %634 = vmatprep.mubr.bf16.mxu0 %v175
  %635 = vmatmul.mubr.bf16.gmra.mrb[0].mxu0 %v174
  %v636 = vpop.f32.mrb[0].mxu0
  %v637 = vadd.f32 %v596, %v636
  %v638 = vpop.f32.mrb[0].mxu0
  %v639 = vpop.f32.mrb[0].mxu0
  %v640 = vadd.f32 %v599, %v639
  %v641 = vpop.f32.mrb[0].mxu0
  %642 = vdwg.mxu0
  %643 = vmatprep.subr.bf16.mxu0 0
  %644 = vmatpush1.bf16.msra.mxu0 %v456
  %645 = vmatprep.subr.bf16.mxu0 0
  %646 = vmatpush1.bf16.msra.mxu0 %v457
  %647 = vmatprep.subr.bf16.mxu0 0
  %648 = vmatpush1.bf16.msra.mxu0 %v458
  %649 = vmatprep.subr.bf16.mxu0 0
  %650 = vmatpush1.bf16.msra.mxu0 %v459
  %651 = vmatprep.subr.bf16.mxu0 0
  %652 = vmatpush1.bf16.msra.mxu0 %v460
  %653 = vmatprep.subr.bf16.mxu0 0
  %654 = vmatpush1.bf16.msra.mxu0 %v461
  %655 = vmatprep.subr.bf16.mxu0 0
  %656 = vmatpush1.bf16.msra.mxu0 %v462
  %657 = vmatprep.subr.bf16.mxu0 0
  %658 = vmatpush1.bf16.msra.mxu0 %v463
  %659 = vmatprep.subr.bf16.mxu0 0
  %660 = vmatpush1.bf16.msra.mxu0 0
  %661 = vmatprep.subr.bf16.mxu0 0
  %662 = vmatpush1.bf16.msra.mxu0 0
  %663 = vmatprep.subr.bf16.mxu0 0
  %664 = vmatpush1.bf16.msra.mxu0 0
  %665 = vmatprep.subr.bf16.mxu0 0
  %666 = vmatpush1.bf16.msra.mxu0 0
  %667 = vmatprep.subr.bf16.mxu0 0
  %668 = vmatpush1.bf16.msra.mxu0 0
  %669 = vmatprep.subr.bf16.mxu0 0
  %670 = vmatpush1.bf16.msra.mxu0 0
  %671 = vmatprep.subr.bf16.mxu0 0
  %672 = vmatpush1.bf16.msra.mxu0 0
  %673 = vmatprep.subr.bf16.mxu0 0
  %674 = vmatpush1.bf16.msra.mxu0 0
  %675 = vmatprep.mubr.bf16.mxu0 0
  %676 = vmatmul.mubr.bf16.gmra.mrb[0].mxu0 %v176
  %v677 = vpop.f32.mrb[0].mxu0
  %v678 = vadd.f32 %v637, %v677
  %v679 = vpop.f32.mrb[0].mxu0
  %v680 = vpop.f32.mrb[0].mxu0
  %v681 = vadd.f32 %v640, %v680
  %v682 = vpop.f32.mrb[0].mxu0
  %683 = vdwg.mxu0
  %v684 = vmax.f32 %v678, 0.0
  %v685 = vmax.f32 %v681, 0.0
  %v686 = vpack.c.bf16 %v685, %v684
  %v687 = vld [vmem:[%s3] sm:$0xf]
  %v688 = vld [vmem:[%s3 + $0x4] sm:$0xf]
  %v689 = vld [vmem:[%s3 + $0x8] sm:$0xf]
  %v690 = vld [vmem:[%s3 + $0xc] sm:$0xf]
  %v691 = vld [vmem:[%s3 + $0x10] sm:$0xf]
  %v692 = vld [vmem:[%s3 + $0x14] sm:$0xf]
  %v693 = vld [vmem:[%s3 + $0x18] sm:$0xf]
  %v694 = vld [vmem:[%s3 + $0x1c] sm:$0xf]
  %v695 = vld [vmem:[%s3 + $0x20] sm:$0xf]
  %v696 = vld [vmem:[%s3 + $0x24] sm:$0xf]
  %v697 = vld [vmem:[%s3 + $0x28] sm:$0xf]
  %v698 = vld [vmem:[%s3 + $0x2c] sm:$0xf]
  %v699 = vld [vmem:[%s3 + $0x30] sm:$0xf]
  %v700 = vld [vmem:[%s3 + $0x34] sm:$0xf]
  %v701 = vld [vmem:[%s3 + $0x38] sm:$0xf]
  %v702 = vld [vmem:[%s3 + $0x3c] sm:$0xf]
  %v703 = vld [vmem:[%s4] sm:$0x1]
  %v705 = vlaneseq
  %v706 = vshrl.u32 %v705, 7
  %v707 = vsub.s32 0, %v706
  %v708 = vrot.slane %v703, %v707
  %v726 = vunpack.c.l.b16 %v687
  %v727 = vunpack.c.l.b16 %v688
  %v728 = vunpack.c.l.b16 %v689
  %v729 = vunpack.c.l.b16 %v690
  %v730 = vunpack.c.l.b16 %v691
  %v731 = vunpack.c.l.b16 %v692
  %v732 = vunpack.c.l.b16 %v693
  %v733 = vunpack.c.l.b16 %v694
  %v734 = vunpack.c.l.b16 %v695
  %v735 = vunpack.c.l.b16 %v696
  %v736 = vunpack.c.l.b16 %v697
  %v737 = vunpack.c.l.b16 %v698
  %v738 = vunpack.c.l.b16 %v699
  %v739 = vunpack.c.l.b16 %v700
  %v740 = vunpack.c.l.b16 %v701
  %v741 = vunpack.c.l.b16 %v702
  %v742 = vpack.c.b16 %v727, %v726
  %v743 = vpack.c.b16 %v729, %v728
  %v744 = vpack.c.b16 %v731, %v730
  %v745 = vpack.c.b16 %v733, %v732
  %v746 = vpack.c.b16 %v735, %v734
  %v747 = vpack.c.b16 %v737, %v736
  %v748 = vpack.c.b16 %v739, %v738
  %v749 = vpack.c.b16 %v741, %v740
  %758 = vmatprep.subr.bf16.mxu0 0
  %759 = vmatpush1.bf16.msra.mxu0 %v742
  %760 = vmatprep.subr.bf16.mxu0 0
  %761 = vmatpush1.bf16.msra.mxu0 %v743
  %762 = vmatprep.subr.bf16.mxu0 0
  %763 = vmatpush1.bf16.msra.mxu0 %v744
  %764 = vmatprep.subr.bf16.mxu0 0
  %765 = vmatpush1.bf16.msra.mxu0 %v745
  %766 = vmatprep.subr.bf16.mxu0 0
  %767 = vmatpush1.bf16.msra.mxu0 %v746
  %768 = vmatprep.subr.bf16.mxu0 0
  %769 = vmatpush1.bf16.msra.mxu0 %v747
  %770 = vmatprep.subr.bf16.mxu0 0
  %771 = vmatpush1.bf16.msra.mxu0 %v748
  %772 = vmatprep.subr.bf16.mxu0 0
  %773 = vmatpush1.bf16.msra.mxu0 %v749
  %774 = vmatprep.subr.bf16.mxu0 0
  %775 = vmatpush1.bf16.msra.mxu0 0
  %776 = vmatprep.subr.bf16.mxu0 0
  %777 = vmatpush1.bf16.msra.mxu0 0
  %778 = vmatprep.subr.bf16.mxu0 0
  %779 = vmatpush1.bf16.msra.mxu0 0
  %780 = vmatprep.subr.bf16.mxu0 0
  %781 = vmatpush1.bf16.msra.mxu0 0
  %782 = vmatprep.subr.bf16.mxu0 0
  %783 = vmatpush1.bf16.msra.mxu0 0
  %784 = vmatprep.subr.bf16.mxu0 0
  %785 = vmatpush1.bf16.msra.mxu0 0
  %786 = vmatprep.subr.bf16.mxu0 0
  %787 = vmatpush1.bf16.msra.mxu0 0
  %788 = vmatprep.subr.bf16.mxu0 0
  %789 = vmatpush1.bf16.msra.mxu0 0
  %790 = vmatprep.mubr.bf16.mxu0 0
  %791 = vmatmul.mubr.bf16.gmra.mrb[0].mxu0 %v686
  %v792 = vpop.f32.mrb[0].mxu0
  %v793 = vadd.f32 %v708, %v792
  %v794 = vpop.f32.mrb[0].mxu0
  %v795 = vpop.f32.mrb[0].mxu0
  %v796 = vadd.f32 %v708, %v795
  %v797 = vpop.f32.mrb[0].mxu0
  %798 = vdwg.mxu0
  %799 = vmax.xlane.f32.xlu0 %v793
  %v800 = vpop.xlane.xlu0 %799
  %801 = vmax.xlane.f32.xlu0 %v796
  %v802 = vpop.xlane.xlu0 %801
  %v803 = vsub.f32 %v793, %v800
  %v804 = vsub.f32 %v796, %v802
  %v805 = vmul.f32 %v803, 1.442695
  %v806 = vpow.pop %v805
  %v807 = vmul.f32 %v804, 1.442695
  %v808 = vpow.pop %v807
  %809 = vadd.xlane.f32.xlu0 %v806
  %v810 = vpop.xlane.xlu0 %809
  %811 = vadd.xlane.f32.xlu0 %v808
  %v812 = vpop.xlane.xlu0 %811
  %v813 = vlog2.pop %v810
  %v814 = vmul.f32 %v813, 0.6931472
  %v815 = vlog2.pop %v812
  %v816 = vmul.f32 %v815, 0.6931472
  %v817 = vsub.f32 %v803, %v814
  %v818 = vsub.f32 %v804, %v816
  %819 = vst [vmem:[%s5] sm:$0xff] %v817
  %820 = vst [vmem:[%s5 + $0x8] sm:$0xff] %v818
  // Predicated region
  $region22: #{mlp_forward.1} parent=0 // pred_check
    _
  $region23: #{mlp_forward.1} parent=0 // pred_check_branch
    %822 = sbr.rel (0) target = $region25
  $region24: #{mlp_forward.1} parent=0 // pred_region
    _
  $region25: #{mlp_forward.1} parent=0 // pred_fallthru
    _
  // Predicated region
  $region26: #{mlp_forward.1} parent=0 // pred_check
    _
  $region27: #{mlp_forward.1} parent=0 // pred_check_branch
    %824 = sbr.rel (0) target = $region29
  $region28: #{mlp_forward.1} parent=0 // pred_region
    _
  $region29: #{mlp_forward.1} parent=0 // pred_fallthru
    _

</llo_original>
